<compile_context>
chip_gen: v5e
topology: v5e:2x2
jax: 0.10.0
libtpu: 0.0.40
codegen_flags: <defaults>
</compile_context>

<pallas_src>
import jax
import jax.numpy as jnp
from jax.experimental import pallas as pl
from jax.experimental.pallas import tpu as pltpu


# Dispatch thresholds.
_VMEM_FASTPATH_TOTAL_BYTES = 2 * 1024 * 1024     # below this, VMEM staging beats DMA setup cost
_MIN_DMA_RUN_BYTES = 512                          # minimum efficient contiguous run for strided HBM DMA
_VMEM_PER_STEP_BUDGET_BYTES = 16 * 1024 * 1024    # v7x-safe (x2 double-buffer -> 32 MiB scoped)


def _concat_dma(xs, channels, N, H, W, c_total, dtype):
    """Collapsed-grid HBM->HBM concat: one whole-tensor strided DMA per input."""
    num_inputs = len(xs)

    def kernel(*refs):
        in_refs = refs[:num_inputs]
        out_ref = refs[num_inputs]
        sems = refs[num_inputs + 1]

        # Start every DMA, then wait on all of them once (no per-batch barriers).
        copies = []
        off = 0
        for i, r in enumerate(in_refs):
            c = r.shape[1]  # static per-input channel count
            cp = pltpu.make_async_copy(
                r,                            # contiguous (N, C_i, H, W) slab in HBM
                out_ref.at[:, off:off + c],   # N runs of C_i*H*W, stride C_total*H*W
                sems.at[i],
            )
            cp.start()
            copies.append(cp)
            off += c
        for cp in copies:
            cp.wait()

    return pl.pallas_call(
        kernel,
        out_shape=jax.ShapeDtypeStruct((N, c_total, H, W), dtype),
        # Everything stays in HBM; the kernel moves the data with explicit DMAs.
        in_specs=[pl.BlockSpec(memory_space=pl.ANY) for _ in xs],
        out_specs=pl.BlockSpec(memory_space=pl.ANY),
        scratch_shapes=[pltpu.SemaphoreType.DMA((num_inputs,))],
    )(*xs)


def _concat_vmem(xs, channels, N, H, W, c_total, dtype):
    """VMEM-staged concat, pipelined over the batch, lane-dense (N, C, H*W) store."""
    num_inputs = len(xs)
    hw = H * W

    def kernel(*refs):
        in_refs = refs[:num_inputs]
        out_ref = refs[num_inputs]
        # Concat on the sublane axis; single lane-dense store of the full block.
        out_ref[...] = jnp.concatenate([r[...] for r in in_refs], axis=1)

    # (N, C_i, H*W) view keeps the concat axis off the lane dimension and makes
    # the output store lane-dense.  Metadata-only for row-major inputs (the DMA
    # path above avoids this reshape entirely for large tensors).
    xs_flat = [x.reshape(N, c, hw) for x, c in zip(xs, channels)]

    out_flat = pl.pallas_call(
        kernel,
        out_shape=jax.ShapeDtypeStruct((N, c_total, hw), dtype),
        grid=(N,),
        in_specs=[pl.BlockSpec((1, c, hw), lambda n: (n, 0, 0)) for c in channels],
        out_specs=pl.BlockSpec((1, c_total, hw), lambda n: (n, 0, 0)),
        compiler_params=pltpu.CompilerParams(dimension_semantics=("parallel",)),
    )(*xs_flat)

    return out_flat.reshape(N, c_total, H, W)


def concat_channels(xs, path=None):
    """Concatenate a list/tuple of NCHW arrays along the channel axis (dim=1).

    path: None = auto dispatch, "dma" = HBM->HBM strided-DMA path,
    "vmem" = VMEM-staged path.
    """
    xs = [x for x in xs if int(x.shape[1]) > 0]   # skip zero-channel operands
    assert len(xs) > 0, "Concat: need at least one non-empty input"
    if len(xs) == 1:
        return xs[0]

    N, _, H, W = xs[0].shape
    dtype = xs[0].dtype
    for x in xs:
        assert x.ndim == 4 and x.shape[0] == N and tuple(x.shape[2:]) == (H, W)
        assert x.dtype == dtype

    channels = [int(x.shape[1]) for x in xs]
    c_total = sum(channels)
    hw = H * W
    itemsize = jnp.dtype(dtype).itemsize

    out_bytes = N * c_total * hw * itemsize
    min_run_bytes = min(c * hw * itemsize for c in channels)
    # VMEM path stages, per grid step, one batch element of every input plus the
    # output block; BlockSpec double-buffers everything -> x2.
    per_step_vmem_bytes = 2 * (2 * c_total * hw * itemsize)
    vmem_ok = per_step_vmem_bytes <= _VMEM_PER_STEP_BUDGET_BYTES

    if path is None:
        if vmem_ok and (out_bytes <= _VMEM_FASTPATH_TOTAL_BYTES
                        or min_run_bytes < _MIN_DMA_RUN_BYTES):
            path = "vmem"
        else:
            path = "dma"

    if path == "vmem":
        return _concat_vmem(xs, channels, N, H, W, c_total, dtype)
    return _concat_dma(xs, channels, N, H, W, c_total, dtype)


if __name__ == "__main__":
    key = jax.random.PRNGKey(0)
    k1, k2, k3 = jax.random.split(key, 3)

    # Small NCHW inputs with differing channel counts (typical neck-concat use).
    x1 = jax.random.normal(k1, (2, 4, 16, 16), dtype=jnp.float32)
    x2 = jax.random.normal(k2, (2, 6, 16, 16), dtype=jnp.float32)
    x3 = jax.random.normal(k3, (2, 2, 16, 16), dtype=jnp.float32)
    xs = [x1, x2, x3]

    ref = jnp.concatenate(xs, axis=1)

    # Auto dispatch (this small case takes the VMEM-staged fast path).
    out_auto = jax.block_until_ready(concat_channels(xs))
    assert out_auto.shape == ref.shape and out_auto.dtype == ref.dtype
    assert jnp.array_equal(out_auto, ref)

    # Exercise the collapsed-grid HBM->HBM DMA path as well.
    out_dma = jax.block_until_ready(concat_channels(xs, path="dma"))
    assert jnp.array_equal(out_dma, ref)

    # And the VMEM path explicitly.
    out_vmem = jax.block_until_ready(concat_channels(xs, path="vmem"))
    assert jnp.array_equal(out_vmem, ref)

    print("KERNEL_OK")
</pallas_src>

<mosaic_0001>
module attributes {stable_mosaic.version = 11 : i64} {
  func.func @kernel(%arg0: i32, %arg1: memref<1x4x256xf32, #tpu.memory_space<vmem>>, %arg2: memref<1x6x256xf32, #tpu.memory_space<vmem>>, %arg3: memref<1x2x256xf32, #tpu.memory_space<vmem>>, %arg4: memref<1x12x256xf32, #tpu.memory_space<vmem>>) attributes {dimension_semantics = [#tpu.dimension_semantics<parallel>], iteration_bounds = array<i64: 2>, scalar_prefetch = 0 : i64, scratch_operands = 0 : i64, tpu.core_type = #tpu.core_type<tc>, window_params = [{transform_indices = @transform_0, window_bounds = array<i64: 1, 4, 256>}, {transform_indices = @transform_1, window_bounds = array<i64: 1, 6, 256>}, {transform_indices = @transform_2, window_bounds = array<i64: 1, 2, 256>}, {transform_indices = @transform_3, window_bounds = array<i64: 1, 12, 256>}]} {
    %c0 = arith.constant 0 : index
    %c0_0 = arith.constant 0 : index
    %c0_1 = arith.constant 0 : index
    %0 = vector.load %arg1[%c0, %c0_0, %c0_1] : memref<1x4x256xf32, #tpu.memory_space<vmem>>, vector<1x4x256xf32>
    %c0_2 = arith.constant 0 : index
    %c0_3 = arith.constant 0 : index
    %c0_4 = arith.constant 0 : index
    %1 = vector.load %arg2[%c0_2, %c0_3, %c0_4] : memref<1x6x256xf32, #tpu.memory_space<vmem>>, vector<1x6x256xf32>
    %c0_5 = arith.constant 0 : index
    %c0_6 = arith.constant 0 : index
    %c0_7 = arith.constant 0 : index
    %2 = vector.load %arg3[%c0_5, %c0_6, %c0_7] : memref<1x2x256xf32, #tpu.memory_space<vmem>>, vector<1x2x256xf32>
    %3 = tpu.concatenate %0, %1, %2 in 1 : vector<1x4x256xf32>, vector<1x6x256xf32>, vector<1x2x256xf32> -> vector<1x12x256xf32>
    %c0_8 = arith.constant 0 : index
    %c0_9 = arith.constant 0 : index
    %c0_10 = arith.constant 0 : index
    %4 = vector.load %arg4[%c0_8, %c0_9, %c0_10] : memref<1x12x256xf32, #tpu.memory_space<vmem>>, vector<1x12x256xf32>
    tpu.vector_store %arg4[%c0_8, %c0_9, %c0_10], %3 {strides = array<i32>} : memref<1x12x256xf32, #tpu.memory_space<vmem>>, vector<1x12x256xf32>,
    return
  }
  func.func @transform_0(%arg0: i32) -> (i32, i32, i32) {
    %c0_i32 = arith.constant 0 : i32
    %c0_i32_0 = arith.constant 0 : i32
    %c0_i32_1 = arith.constant 0 : i32
    return %arg0, %c0_i32, %c0_i32_0 : i32, i32, i32
  }
  func.func @transform_1(%arg0: i32) -> (i32, i32, i32) {
    %c0_i32 = arith.constant 0 : i32
    %c0_i32_0 = arith.constant 0 : i32
    %c0_i32_1 = arith.constant 0 : i32
    return %arg0, %c0_i32, %c0_i32_0 : i32, i32, i32
  }
  func.func @transform_2(%arg0: i32) -> (i32, i32, i32) {
    %c0_i32 = arith.constant 0 : i32
    %c0_i32_0 = arith.constant 0 : i32
    %c0_i32_1 = arith.constant 0 : i32
    return %arg0, %c0_i32, %c0_i32_0 : i32, i32, i32
  }
  func.func @transform_3(%arg0: i32) -> (i32, i32, i32) {
    %c0_i32 = arith.constant 0 : i32
    %c0_i32_0 = arith.constant 0 : i32
    %c0_i32_1 = arith.constant 0 : i32
    return %arg0, %c0_i32, %c0_i32_0 : i32, i32, i32
  }
}

</mosaic_0001>

<llo_original>
// kernel: tpu_custom_call.1
$region0: #{tpu_custom_call.1}
  #allocation0 [shape = 'u32[]', space=smem, size = 0x4, offset = 0x4, fixed_abs, tag = 'smem constant byte address 0x4 - core index']
  #allocation1 [shape = 'u32[72,128]{1,0:T(1,128)}', space=vmem, size = 0x9000, scoped, tag = 'internal scratch']
  %s0 = inlined_call_operand.vmem [shape: f32[2,4,256], index: 0, kind: input, shape index: {}]
  %s1 = inlined_call_operand.vmem [shape: f32[2,6,256], index: 1, kind: input, shape index: {}]
  %s2 = inlined_call_operand.vmem [shape: f32[2,2,256], index: 2, kind: input, shape index: {}]
  %s3 = inlined_call_operand.vmem [shape: f32[2,12,256], index: 3, kind: output, shape index: {}]
  %s4 = sld [smem:[#allocation0]]
  $region45: #{tpu_custom_call.1} parent=0
    _
  %s6 = ssub.s32 1, %s4
  %s7 = scalar_select 0, %s6, %s4
  loop: start=0, step=1, limit=4
  $region2: #{tpu_custom_call.1} parent=0 // loop_pre_header
    _
  $region3: #{tpu_custom_call.1} parent=0 // loop_header
    %s9 = sphi 0, %s13
    %p10 = scmp.ge.s32.totalorder %s9, 4
    %s19 = sphi 0, %s21
    %s22 = sphi 0, %s19
    %s23 = sphi 0, %s22
    %s39 = sphi 0, %s23
    %s45 = sphi 0, %s47
    %s48 = sphi 0, %s45
    %s49 = sphi 0, %s48
    %s65 = sphi 0, %s49
    %s71 = sphi 0, %s73
    %s74 = sphi 0, %s71
    %s75 = sphi 0, %s74
    %s91 = sphi 0, %s75
    %s97 = sphi 0, %s99
    %s100 = sphi 0, %s97
    %s101 = sphi 0, %s100
    %s117 = sphi 0, %s101
  $region4: #{tpu_custom_call.1} parent=0 // loop_header_branch
    %12 = sbr.rel (%p10) target = $region8
  $region5: #{tpu_custom_call.1} parent=0 // loop_body
    %s14 = ssub.s32 %s9, 1
    %s15 = ssub.s32 %s9, 2
    %s16 = sadd.s32 %s9, 1
    %s17 = ssub.s32 %s9, %s16
    %p18 = scmp.eq.s32.totalorder %s17, 0
    %s20 = sadd.s32 %s19, 1
    %s21 = scalar_select %p18, %s19, %s20
    %p24 = pneg %p18
    %p25 = scmp.eq.s32.totalorder %s9, 1
    %p26 = por %p24, %p25
    %p27 = scmp.ne.s32.totalorder %s19, %s22
    %p28 = scmp.eq.s32.totalorder %s9, 0
    %p29 = por %p27, %p28
    %p30 = scmp.ne.s32.totalorder %s19, %s22
    %p31 = scmp.eq.s32.totalorder %s14, 1
    %p32 = por %p30, %p31
    %p33 = scmp.ne.s32.totalorder %s22, %s23
    %p34 = scmp.eq.s32.totalorder %s14, 0
    %p35 = por %p33, %p34
    %p36 = scmp.ne.s32.totalorder %s22, %s23
    %p37 = scmp.eq.s32.totalorder %s15, 1
    %p38 = por %p36, %p37
    %p40 = scmp.ne.s32.totalorder %s23, %s39
    %p41 = scmp.eq.s32.totalorder %s15, 0
    %p42 = por %p40, %p41
    %s43 = ssub.s32 %s9, %s16
    %p44 = scmp.eq.s32.totalorder %s43, 0
    %s46 = sadd.s32 %s45, 1
    %s47 = scalar_select %p44, %s45, %s46
    %p50 = pneg %p44
    %p51 = scmp.eq.s32.totalorder %s9, 1
    %p52 = por %p50, %p51
    %p53 = scmp.ne.s32.totalorder %s45, %s48
    %p54 = scmp.eq.s32.totalorder %s9, 0
    %p55 = por %p53, %p54
    %p56 = scmp.ne.s32.totalorder %s45, %s48
    %p57 = scmp.eq.s32.totalorder %s14, 1
    %p58 = por %p56, %p57
    %p59 = scmp.ne.s32.totalorder %s48, %s49
    %p60 = scmp.eq.s32.totalorder %s14, 0
    %p61 = por %p59, %p60
    %p62 = scmp.ne.s32.totalorder %s48, %s49
    %p63 = scmp.eq.s32.totalorder %s15, 1
    %p64 = por %p62, %p63
    %p66 = scmp.ne.s32.totalorder %s49, %s65
    %p67 = scmp.eq.s32.totalorder %s15, 0
    %p68 = por %p66, %p67
    %s69 = ssub.s32 %s9, %s16
    %p70 = scmp.eq.s32.totalorder %s69, 0
    %s72 = sadd.s32 %s71, 1
    %s73 = scalar_select %p70, %s71, %s72
    %p76 = pneg %p70
    %p77 = scmp.eq.s32.totalorder %s9, 1
    %p78 = por %p76, %p77
    %p79 = scmp.ne.s32.totalorder %s71, %s74
    %p80 = scmp.eq.s32.totalorder %s9, 0
    %p81 = por %p79, %p80
    %p82 = scmp.ne.s32.totalorder %s71, %s74
    %p83 = scmp.eq.s32.totalorder %s14, 1
    %p84 = por %p82, %p83
    %p85 = scmp.ne.s32.totalorder %s74, %s75
    %p86 = scmp.eq.s32.totalorder %s14, 0
    %p87 = por %p85, %p86
    %p88 = scmp.ne.s32.totalorder %s74, %s75
    %p89 = scmp.eq.s32.totalorder %s15, 1
    %p90 = por %p88, %p89
    %p92 = scmp.ne.s32.totalorder %s75, %s91
    %p93 = scmp.eq.s32.totalorder %s15, 0
    %p94 = por %p92, %p93
    %s95 = ssub.s32 %s9, %s16
    %p96 = scmp.eq.s32.totalorder %s95, 0
    %s98 = sadd.s32 %s97, 1
    %s99 = scalar_select %p96, %s97, %s98
    %p102 = pneg %p96
    %p103 = scmp.eq.s32.totalorder %s9, 1
    %p104 = por %p102, %p103
    %p105 = scmp.ne.s32.totalorder %s97, %s100
    %p106 = scmp.eq.s32.totalorder %s9, 0
    %p107 = por %p105, %p106
    %p108 = scmp.ne.s32.totalorder %s97, %s100
    %p109 = scmp.eq.s32.totalorder %s14, 1
    %p110 = por %p108, %p109
    %p111 = scmp.ne.s32.totalorder %s100, %s101
    %p112 = scmp.eq.s32.totalorder %s14, 0
    %p113 = por %p111, %p112
    %p114 = scmp.ne.s32.totalorder %s100, %s101
    %p115 = scmp.eq.s32.totalorder %s15, 1
    %p116 = por %p114, %p115
    %p118 = scmp.ne.s32.totalorder %s101, %s117
    %p119 = scmp.eq.s32.totalorder %s15, 0
    %p120 = por %p118, %p119
    %p121 = scmp.le.s32.totalorder 1, %s9
    %p122 = scmp.lt.s32.totalorder %s9, 3
    %p123 = pnand %p121, %p122
    %p124 = pneg %p123
    // Predicated region
    $region9: #{tpu_custom_call.1} parent=5 // pred_check
      _
    $region10: #{tpu_custom_call.1} parent=5 // pred_check_branch
      %126 = sbr.rel (%p123) target = $region12
    $region11: #{tpu_custom_call.1} parent=5 // pred_region
      %s127 = ssub.s32 %s9, 1
    $region12: #{tpu_custom_call.1} parent=5 // pred_fallthru
      _
    %p128 = scmp.lt.s32.totalorder %s9, 2
    // Predicated region
    $region13: #{tpu_custom_call.1} parent=5 // pred_check
      %p129 = pneg %p128
    $region14: #{tpu_custom_call.1} parent=5 // pred_check_branch
      %131 = sbr.rel (%p129) target = $region16
    $region15: #{tpu_custom_call.1} parent=5 // pred_region
      // Predicated region
      $region17: #{tpu_custom_call.1} parent=15 // pred_check
        %p132 = pneg %p29
      $region18: #{tpu_custom_call.1} parent=15 // pred_check_branch
        %134 = sbr.rel (%p132) target = $region20
      $region19: #{tpu_custom_call.1} parent=15 // pred_region
        %p135 = scmp.lt.s32.totalorder %s9, 1
        %s136 = scalar_select %p135, %s9, 1
        %s137 = smul.addr %s136, 2
        %s138 = smul.addr %s137, 4
        %s139 = scalar_lea.vmem %s0, %s138
      $region20: #{tpu_custom_call.1} parent=15 // pred_fallthru
        _
      // Predicated region
      $region21: #{tpu_custom_call.1} parent=15 // pred_check
        %p140 = pneg %p55
      $region22: #{tpu_custom_call.1} parent=15 // pred_check_branch
        %142 = sbr.rel (%p140) target = $region24
      $region23: #{tpu_custom_call.1} parent=15 // pred_region
        %p143 = scmp.lt.s32.totalorder %s9, 1
        %s144 = scalar_select %p143, %s9, 1
        %s145 = smul.addr %s144, 2
        %s146 = smul.addr %s145, 8
        %s147 = scalar_lea.vmem %s1, %s146
      $region24: #{tpu_custom_call.1} parent=15 // pred_fallthru
        _
      // Predicated region
      $region25: #{tpu_custom_call.1} parent=15 // pred_check
        %p148 = pneg %p81
      $region26: #{tpu_custom_call.1} parent=15 // pred_check_branch
        %150 = sbr.rel (%p148) target = $region28
      $region27: #{tpu_custom_call.1} parent=15 // pred_region
        %p151 = scmp.lt.s32.totalorder %s9, 1
        %s152 = scalar_select %p151, %s9, 1
        %s153 = smul.addr %s152, 2
        %s154 = smul.addr %s153, 2
        %s155 = scalar_lea.vmem %s2, %s154
      $region28: #{tpu_custom_call.1} parent=15 // pred_fallthru
        _
    $region16: #{tpu_custom_call.1} parent=5 // pred_fallthru
      _
    %p156 = scmp.le.s32.totalorder 1, %s9
    %p157 = scmp.lt.s32.totalorder %s9, 3
    %p158 = pnand %p156, %p157
    %p159 = pneg %p158
    // Predicated region
    $region29: #{tpu_custom_call.1} parent=5 // pred_check
      _
    $region30: #{tpu_custom_call.1} parent=5 // pred_check_branch
      %161 = sbr.rel (%p158) target = $region32
    $region31: #{tpu_custom_call.1} parent=5 // pred_region
      %s162 = ssub.s32 %s9, 1
      %p163 = scmp.lt.s32.totalorder %s14, 1
      %s164 = scalar_select %p163, %s14, 1
      %s165 = smul.addr %s164, 2
      %s166 = smul.addr %s165, 4
      %s167 = scalar_lea.vmem %s0, %s166
      %p168 = pneg %p35
      %p169 = pneg %p32
      %p170 = scmp.lt.s32.totalorder %s14, 1
      %s171 = scalar_select %p170, %s14, 1
      %s172 = smul.addr %s171, 2
      %s173 = smul.addr %s172, 8
      %s174 = scalar_lea.vmem %s1, %s173
      %p175 = pneg %p61
      %p176 = pneg %p58
      %p177 = scmp.lt.s32.totalorder %s14, 1
      %s178 = scalar_select %p177, %s14, 1
      %s179 = smul.addr %s178, 2
      %s180 = smul.addr %s179, 2
      %s181 = scalar_lea.vmem %s2, %s180
      %p182 = pneg %p87
      %p183 = pneg %p84
      %p184 = pneg %p113
      %p185 = pneg %p110
      %p186 = scmp.lt.s32.totalorder %s14, 1
      %s187 = scalar_select %p186, %s14, 1
      %s188 = smul.addr %s187, 4
      %s189 = smul.addr %s188, 8
      %s190 = scalar_lea.vmem %s3, %s189
      %p191 = scmp.lt.s32.totalorder %s14, 1
      %s192 = scalar_select %p191, %s14, 1
      %s193 = smul.addr %s192, 2
      %s194 = smul.addr %s193, 4
      %s195 = scalar_lea.vmem %s0, %s194
      %p196 = scmp.lt.s32.totalorder %s14, 1
      %s197 = scalar_select %p196, %s14, 1
      %s198 = smul.addr %s197, 2
      %s199 = smul.addr %s198, 8
      %s200 = scalar_lea.vmem %s1, %s199
      %p201 = scmp.lt.s32.totalorder %s14, 1
      %s202 = scalar_select %p201, %s14, 1
      %s203 = smul.addr %s202, 2
      %s204 = smul.addr %s203, 2
      %s205 = scalar_lea.vmem %s2, %s204
      %p206 = scmp.lt.s32.totalorder %s14, 1
      %s207 = scalar_select %p206, %s14, 1
      %s208 = smul.addr %s207, 4
      %s209 = smul.addr %s208, 8
      %s210 = scalar_lea.vmem %s3, %s209
      %v211 = vld [vmem:[%s195] sm:$0xff]
      %v212 = vld [vmem:[%s200] sm:$0x3f]
      %v213 = vld [vmem:[%s200 + $0x8] sm:$0x3f]
      %v214 = vld [vmem:[%s205] sm:$0xf]
      %216 = vst [vmem:[#allocation1] ss:$2 sm:$0xff] %v211
      %v217 = vld.sshfl [vmem:[#allocation1] sm:$0xff pattern:$0x75316420]
      %v218 = vld.sshfl [vmem:[#allocation1 + $0x8] sm:$0xff pattern:$0x75316420]
      %v223 = vrot.slane %v212, 4
      %v224 = vrot.slane %v213, 4
      %s228 = scalar_lea.vmem [#allocation1], 1
      %229 = vst [vmem:[%s228] ss:$4 sm:$0xff] %v214
      %v230 = vld.sshfl [vmem:[#allocation1] sm:$0xff pattern:$0x73625140]
      %v231 = vld.sshfl [vmem:[#allocation1 + $0x8] sm:$0xff pattern:$0x73625140]
      %vm234 = vcmask 1043456
      %v235 = vsel %vm234, %v217, %v223
      %v236 = vsel %vm234, %v218, %v224
      %vm237 = vcmask 1041408
      %v238 = vsel %vm237, %v223, %v230
      %v239 = vsel %vm237, %v224, %v231
      %240 = vst [vmem:[%s210] sm:$0xff] %v235
      %241 = vst [vmem:[%s210 + $0x8] sm:$0xff] %v236
      %242 = vst [vmem:[%s210 + $0x10] sm:$0xf] %v238
      %243 = vst [vmem:[%s210 + $0x18] sm:$0xf] %v239
      %p244 = scmp.lt.s32.totalorder %s14, 1
      %s245 = scalar_select %p244, %s14, 1
      %s246 = smul.addr %s245, 4
      %s247 = smul.addr %s246, 8
      %s248 = scalar_lea.vmem %s3, %s247
      // Predicated region
      $region33: #{tpu_custom_call.1} parent=31 // pred_check
        %p249 = pneg %p110
      $region34: #{tpu_custom_call.1} parent=31 // pred_check_branch
        %251 = sbr.rel (%p249) target = $region36
      $region35: #{tpu_custom_call.1} parent=31 // pred_region
        _
      $region36: #{tpu_custom_call.1} parent=31 // pred_fallthru
        _
    $region32: #{tpu_custom_call.1} parent=5 // pred_fallthru
      _
    %p252 = scmp.le.s32.totalorder 2, %s9
    // Predicated region
    $region37: #{tpu_custom_call.1} parent=5 // pred_check
      %p253 = pneg %p252
    $region38: #{tpu_custom_call.1} parent=5 // pred_check_branch
      %255 = sbr.rel (%p253) target = $region40
    $region39: #{tpu_custom_call.1} parent=5 // pred_region
      %s256 = ssub.s32 %s9, 2
      // Predicated region
      $region41: #{tpu_custom_call.1} parent=39 // pred_check
        %p257 = pneg %p116
      $region42: #{tpu_custom_call.1} parent=39 // pred_check_branch
        %259 = sbr.rel (%p257) target = $region44
      $region43: #{tpu_custom_call.1} parent=39 // pred_region
        %p260 = scmp.lt.s32.totalorder %s15, 1
        %s261 = scalar_select %p260, %s15, 1
        %s262 = smul.addr %s261, 4
        %s263 = smul.addr %s262, 8
        %s264 = scalar_lea.vmem %s3, %s263
      $region44: #{tpu_custom_call.1} parent=39 // pred_fallthru
        _
    $region40: #{tpu_custom_call.1} parent=5 // pred_fallthru
      _
  $region6: #{tpu_custom_call.1} parent=0 // loop_footer
    %s13 = sadd.s32 1, %s9
  $region7: #{tpu_custom_call.1} parent=0 // loop_footer_branch
    %8 = sbr.rel target = $region3
  $region8: #{tpu_custom_call.1} parent=0 // loop_exit
    _

</llo_original>
